<compile_context>
chip_gen: v6e
topology: v6e:2x2x1
jax: 0.10.0
libtpu: 0.0.40
codegen_flags: <defaults>
</compile_context>

<pallas_src>
import jax
import jax.numpy as jnp
from jax.experimental import pallas as pl
from jax.experimental.pallas import tpu as pltpu


def _round_up(x, m):
    return ((x + m - 1) // m) * m


def _char_emb_kernel(x_ref, w_ref, o_ref):
    """x_ref: (TM, V) tile of dense char features, original dtype.
       w_ref: (V, D) full pre-transposed weight (bf16), VMEM-resident.
       o_ref: (TM, D) output tile."""
    w = w_ref[...]
    x = x_ref[...].astype(w.dtype)            # per-tile cast, right before MXU
    y = jnp.dot(x, w, preferred_element_type=jnp.float32)
    o_ref[...] = jnp.tanh(y).astype(o_ref.dtype)


def prepare_char_proj_weight(w_proj, compute_dtype=jnp.bfloat16):
    """nn.Linear weight (d_vec, char_vsize) -> (char_vsize, d_vec), pre-cast.
    Done ONCE at init so neither the transpose nor the cast is paid per call."""
    return jnp.asarray(w_proj).astype(compute_dtype).T


def _pick_tm(M, V, D, x_itemsize, out_itemsize, w_bytes,
             tm_max=2048, vmem_budget=24 * 1024 * 1024):
    """Largest multiple-of-16 row tile whose double-buffered x/out tiles plus
    the resident weight fit the VMEM budget (conservative across v5e/v6e/v7x)."""
    per_row = 2 * V * x_itemsize + 2 * D * out_itemsize   # double-buffered tiles
    avail = max(vmem_budget - w_bytes, per_row * 16)
    tm = min(tm_max, max(16, (avail // per_row) // 16 * 16))
    tm = min(tm, _round_up(M, 16))
    # Give the second TensorCore (v7x) work when M is large enough for >=2 tiles.
    if M >= 512 and tm >= M:
        tm = _round_up((M + 1) // 2, 16)
    return int(tm)


@jax.jit
def char_embedder_forward(x_train_char, w_proj_t):
    """x_train_char: (B, S, V) dense char features (stacked sentences), any dtype.
       w_proj_t:     (V, D) pre-transposed, pre-cast projection weight
                     (see prepare_char_proj_weight).
       Returns (B, S, D) = tanh(x @ W^T) in a float dtype."""
    B, S, V = x_train_char.shape
    Vw, D = w_proj_t.shape
    assert Vw == V, "weight/input char_vsize mismatch"

    # Force a float output dtype (integer count inputs must not truncate tanh).
    if jnp.issubdtype(x_train_char.dtype, jnp.floating):
        out_dtype = x_train_char.dtype
    else:
        out_dtype = jnp.float32

    M = B * S
    x2d = x_train_char.reshape(M, V)          # free reshape, no copy/cast/pad

    w_bytes = V * D * jnp.dtype(w_proj_t.dtype).itemsize
    tm = _pick_tm(M, V, D,
                  jnp.dtype(x_train_char.dtype).itemsize,
                  jnp.dtype(out_dtype).itemsize,
                  w_bytes)

    out2d = pl.pallas_call(
        _char_emb_kernel,
        out_shape=jax.ShapeDtypeStruct((M, D), out_dtype),
        grid=(pl.cdiv(M, tm),),
        in_specs=[
            pl.BlockSpec((tm, V), lambda m: (m, 0)),   # x tile (partial M tail ok)
            pl.BlockSpec((V, D), lambda m: (0, 0)),    # whole W^T, loaded once
        ],
        out_specs=pl.BlockSpec((tm, D), lambda m: (m, 0)),
        compiler_params=pltpu.CompilerParams(
            dimension_semantics=("parallel",),
            vmem_limit_bytes=32 * 1024 * 1024,
        ),
    )(x2d, w_proj_t)

    return out2d.reshape(B, S, D)


if __name__ == "__main__":
    # Small shapes consistent with the module: batch=2 sentences, seq=8 tokens.
    # char_vsize=200 / d_vec=96 are deliberately NOT multiples of 128 to
    # exercise the non-divisible (full-extent) block path.
    B, S, V, D = 2, 8, 200, 96

    key = jax.random.PRNGKey(0)
    k_x, k_w = jax.random.split(key)

    # Simulate sparse char-count features converted to dense (sparse-ish, >=0).
    x_dense = jax.random.uniform(k_x, (B, S, V), dtype=jnp.float32)
    x_dense = jnp.where(x_dense > 0.8, x_dense, 0.0)

    # Deterministic init of char_emb_proj.weight: shape (d_vec, char_vsize).
    bound = 1.0 / (V ** 0.5)
    w_proj = jax.random.uniform(
        k_w, (D, V), dtype=jnp.float32, minval=-bound, maxval=bound
    )

    # One-time weight prep (transpose + bf16 cast hoisted out of the call path).
    w_t = prepare_char_proj_weight(w_proj)

    out = char_embedder_forward(x_dense, w_t)
    out = jax.block_until_ready(out)

    # Reference check against plain JAX f32 (same semantics as the PyTorch
    # module). Tolerance accounts for bf16 MXU inputs with f32 accumulation.
    ref = jnp.tanh(jnp.einsum("bsv,dv->bsd", x_dense, w_proj))
    assert out.shape == (B, S, D)
    assert out.dtype == x_dense.dtype
    assert jnp.allclose(out, ref, atol=2e-2, rtol=2e-2)

    print("KERNEL_OK")
</pallas_src>

<mosaic_0001>
module attributes {stable_mosaic.version = 11 : i64} {
  func.func @_char_emb_kernel(%arg0: i32, %arg1: memref<16x200xf32, #tpu.memory_space<vmem>>, %arg2: memref<200x96xbf16, #tpu.memory_space<vmem>>, %arg3: memref<16x96xf32, #tpu.memory_space<vmem>>) attributes {dimension_semantics = [#tpu.dimension_semantics<parallel>], iteration_bounds = array<i64: 1>, scalar_prefetch = 0 : i64, scratch_operands = 0 : i64, tpu.core_type = #tpu.core_type<tc>, window_params = [{transform_indices = @transform_0, window_bounds = array<i64: 16, 200>}, {pipeline_mode = #tpu.pipeline_mode<synchronous>, transform_indices = @transform_1, window_bounds = array<i64: 200, 96>}, {transform_indices = @transform_2, window_bounds = array<i64: 16, 96>}]} {
    %c0 = arith.constant 0 : index
    %c0_0 = arith.constant 0 : index
    %0 = vector.load %arg2[%c0, %c0_0] : memref<200x96xbf16, #tpu.memory_space<vmem>>, vector<200x96xbf16>
    %c0_1 = arith.constant 0 : index
    %c0_2 = arith.constant 0 : index
    %1 = vector.load %arg1[%c0_1, %c0_2] : memref<16x200xf32, #tpu.memory_space<vmem>>, vector<16x200xf32>
    %2 = arith.truncf %1 : vector<16x200xf32> to vector<16x200xbf16>
    %cst = arith.constant dense<0.000000e+00> : vector<16x96xf32>
    %3 = tpu.matmul %2, %0, %cst {dimension_numbers = #tpu.dot_dimension_numbers<[1], [0], [0], [1], [0, 0, 1, 1], [], []>} : vector<16x200xbf16>, vector<200x96xbf16>, vector<16x96xf32> -> vector<16x96xf32>
    %4 = math.tanh %3 : vector<16x96xf32>
    %c0_3 = arith.constant 0 : index
    %c0_4 = arith.constant 0 : index
    %5 = vector.load %arg3[%c0_3, %c0_4] : memref<16x96xf32, #tpu.memory_space<vmem>>, vector<16x96xf32>
    tpu.vector_store %arg3[%c0_3, %c0_4], %4 {strides = array<i32>} : memref<16x96xf32, #tpu.memory_space<vmem>>, vector<16x96xf32>,
    return
  }
  func.func @transform_0(%arg0: i32) -> (i32, i32) {
    %c0_i32 = arith.constant 0 : i32
    %c0_i32_0 = arith.constant 0 : i32
    return %arg0, %c0_i32 : i32, i32
  }
  func.func @transform_1(%arg0: i32) -> (i32, i32) {
    %c0_i32 = arith.constant 0 : i32
    %c0_i32_0 = arith.constant 0 : i32
    %c0_i32_1 = arith.constant 0 : i32
    return %c0_i32, %c0_i32_0 : i32, i32
  }
  func.func @transform_2(%arg0: i32) -> (i32, i32) {
    %c0_i32 = arith.constant 0 : i32
    %c0_i32_0 = arith.constant 0 : i32
    return %arg0, %c0_i32 : i32, i32
  }
}

</mosaic_0001>

<llo_original>
// kernel: char_embedder_forward.1
$region0: #{char_embedder_forward.1}
  #allocation0 [shape = 'u32[]', space=smem, size = 0x4, offset = 0x4, fixed_abs, tag = 'smem constant byte address 0x4 - core index']
  #allocation1 [shape = 'u32[144,128]{1,0:T(1,128)}', space=vmem, size = 0x12000, scoped, tag = 'internal scratch']
  %s0 = inlined_call_operand.vmem [shape: f32[16,200], index: 0, kind: input, shape index: {}]
  %s1 = inlined_call_operand.vmem [shape: bf16[200,96], index: 1, kind: input, shape index: {}]
  %s2 = inlined_call_operand.hbm [shape: f32[16,96], index: 2, kind: output, shape index: {}]
  %s3 = sld [smem:[#allocation0]]
  $region18: #{char_embedder_forward.1} parent=0
    _
  %s5 = ssub.s32 1, %s3
  %s6 = scalar_select 0, %s5, %s3
  $region1: #{char_embedder_forward.1} parent=0
    #allocation2 [shape = 'u8[8192]{0}', space=vmem, size = 0x2000, scoped, tag = 'output window, operand 0, single buffered']
    #allocation3 [shape = 's32[1]{0}', space=sflag, size = 0x4, scoped, tag = 'scoped memory for char_embedder_forward.1']
    %7 = vsyncpa [#allocation3], 0
    // Predicated region
    $region2: #{char_embedder_forward.1} parent=1 // pred_check
      _
    $region3: #{char_embedder_forward.1} parent=1 // pred_check_branch
      %9 = sbr.rel (0) target = $region5
    $region4: #{char_embedder_forward.1} parent=1 // pred_region
      _
    $region5: #{char_embedder_forward.1} parent=1 // pred_fallthru
      _
    // Predicated region
    $region6: #{char_embedder_forward.1} parent=1 // pred_check
      _
    $region7: #{char_embedder_forward.1} parent=1 // pred_check_branch
      %11 = sbr.rel (0) target = $region9
    $region8: #{char_embedder_forward.1} parent=1 // pred_region
      _
    $region9: #{char_embedder_forward.1} parent=1 // pred_fallthru
      _
    %v13 = vld [vmem:[%s1] sm:$0xf]
    %v14 = vld [vmem:[%s1 + $0x4] sm:$0xf]
    %v15 = vld [vmem:[%s1 + $0x8] sm:$0xf]
    %v16 = vld [vmem:[%s1 + $0xc] sm:$0xf]
    %v17 = vld [vmem:[%s1 + $0x10] sm:$0xf]
    %v18 = vld [vmem:[%s1 + $0x14] sm:$0xf]
    %v19 = vld [vmem:[%s1 + $0x18] sm:$0xf]
    %v20 = vld [vmem:[%s1 + $0x1c] sm:$0xf]
    %v21 = vld [vmem:[%s1 + $0x20] sm:$0xf]
    %v22 = vld [vmem:[%s1 + $0x24] sm:$0xf]
    %v23 = vld [vmem:[%s1 + $0x28] sm:$0xf]
    %v24 = vld [vmem:[%s1 + $0x2c] sm:$0xf]
    %v25 = vld [vmem:[%s1 + $0x30] sm:$0xf]
    %v26 = vld [vmem:[%s1 + $0x34] sm:$0xf]
    %v27 = vld [vmem:[%s1 + $0x38] sm:$0xf]
    %v28 = vld [vmem:[%s1 + $0x3c] sm:$0xf]
    %v29 = vld [vmem:[%s1 + $0x40] sm:$0xf]
    %v30 = vld [vmem:[%s1 + $0x44] sm:$0xf]
    %v31 = vld [vmem:[%s1 + $0x48] sm:$0xf]
    %v32 = vld [vmem:[%s1 + $0x4c] sm:$0xf]
    %v33 = vld [vmem:[%s1 + $0x50] sm:$0xf]
    %v34 = vld [vmem:[%s1 + $0x54] sm:$0xf]
    %v35 = vld [vmem:[%s1 + $0x58] sm:$0xf]
    %v36 = vld [vmem:[%s1 + $0x5c] sm:$0xf]
    %v37 = vld [vmem:[%s1 + $0x60] sm:$0xf]
    %v38 = vld [vmem:[%s0] sm:$0xff]
    %v39 = vld [vmem:[%s0 + $0x8] sm:$0xff]
    %v40 = vld [vmem:[%s0 + $0x10] sm:$0xff]
    %v41 = vld [vmem:[%s0 + $0x18] sm:$0xff]
    %v42 = vpack.c.bf16 %v40, %v38
    %v43 = vpack.c.bf16 %v41, %v39
    %v69 = vunpack.c.l.b16 %v13
    %v70 = vunpack.c.l.b16 %v14
    %v71 = vunpack.c.l.b16 %v15
    %v72 = vunpack.c.l.b16 %v16
    %v73 = vunpack.c.l.b16 %v17
    %v74 = vunpack.c.l.b16 %v18
    %v75 = vunpack.c.l.b16 %v19
    %v76 = vunpack.c.l.b16 %v20
    %v77 = vunpack.c.l.b16 %v21
    %v78 = vunpack.c.l.b16 %v22
    %v79 = vunpack.c.l.b16 %v23
    %v80 = vunpack.c.l.b16 %v24
    %v81 = vunpack.c.l.b16 %v25
    %v82 = vunpack.c.l.b16 %v26
    %v83 = vunpack.c.l.b16 %v27
    %v84 = vunpack.c.l.b16 %v28
    %v85 = vunpack.c.l.b16 %v29
    %v86 = vunpack.c.l.b16 %v30
    %v87 = vunpack.c.l.b16 %v31
    %v88 = vunpack.c.l.b16 %v32
    %v89 = vunpack.c.l.b16 %v33
    %v90 = vunpack.c.l.b16 %v34
    %v91 = vunpack.c.l.b16 %v35
    %v92 = vunpack.c.l.b16 %v36
    %v93 = vunpack.c.l.b16 %v37
    %v94 = vpack.c.b16 %v70, %v69
    %v95 = vpack.c.b16 %v72, %v71
    %v96 = vpack.c.b16 %v74, %v73
    %v97 = vpack.c.b16 %v76, %v75
    %v98 = vpack.c.b16 %v78, %v77
    %v99 = vpack.c.b16 %v80, %v79
    %v100 = vpack.c.b16 %v82, %v81
    %v101 = vpack.c.b16 %v84, %v83
    %v102 = vpack.c.b16 %v86, %v85
    %v103 = vpack.c.b16 %v88, %v87
    %v104 = vpack.c.b16 %v90, %v89
    %v105 = vpack.c.b16 %v92, %v91
    %v106 = vpack.c.b16 %v93, %v93
    %vm119 = vcmask 588800
    %v121 = vsel %vm119, %v43, 0
    %vm123 = vcmask 1043456
    %v125 = vsel %vm123, %v106, 0
    %127 = vmatprep.subr.bf16.mxu0 0
    %128 = vmatpush1.bf16.msra.mxu0 %v101
    %129 = vmatprep.subr.bf16.mxu0 0
    %130 = vmatpush1.bf16.msra.mxu0 %v100
    %131 = vmatprep.subr.bf16.mxu0 0
    %132 = vmatpush1.bf16.msra.mxu0 %v99
    %133 = vmatprep.subr.bf16.mxu0 0
    %134 = vmatpush1.bf16.msra.mxu0 %v98
    %135 = vmatprep.subr.bf16.mxu0 0
    %136 = vmatpush1.bf16.msra.mxu0 %v97
    %137 = vmatprep.subr.bf16.mxu0 0
    %138 = vmatpush1.bf16.msra.mxu0 %v96
    %139 = vmatprep.subr.bf16.mxu0 0
    %140 = vmatpush1.bf16.msra.mxu0 %v95
    %141 = vmatprep.subr.bf16.mxu0 0
    %142 = vmatpush1.bf16.msra.mxu0 %v94
    %143 = vmatprep.subr.bf16.mxu0 0
    %144 = vmatpush2.bf16.msra.mxu0 0
    %145 = vmatprep.subr.bf16.mxu0 0
    %146 = vmatpush2.bf16.msra.mxu0 0
    %147 = vmatprep.subr.bf16.mxu0 0
    %148 = vmatpush2.bf16.msra.mxu0 0
    %149 = vmatprep.subr.bf16.mxu0 0
    %150 = vmatpush2.bf16.msra.mxu0 %v125
    %151 = vmatprep.subr.bf16.mxu0 0
    %152 = vmatpush2.bf16.msra.mxu0 %v105
    %153 = vmatprep.subr.bf16.mxu0 0
    %154 = vmatpush2.bf16.msra.mxu0 %v104
    %155 = vmatprep.subr.bf16.mxu0 0
    %156 = vmatpush2.bf16.msra.mxu0 %v103
    %157 = vmatprep.subr.bf16.mxu0 0
    %158 = vmatpush2.bf16.msra.mxu0 %v102
    %159 = vmatprep.mubr.bf16.mxu0 %v121
    %160 = vmatmul.mubr.bf16.gmra.mxu0 %v42
    %v161 = vpop.f32.mrf.mxu0
    %v162 = vadd.f32 0.0, %v161
    %v163 = vpop.f32.mrf.mxu0
    %v164 = vpop.f32.mrf.mxu0
    %v165 = vadd.f32 0.0, %v164
    %v166 = vpop.f32.mrf.mxu0
    %167 = vdwg.mxu0
    %v168 = vtanh.pop %v162
    %v169 = vtanh.pop %v165
    %vm170 = vcmask 785408
    %171 = vst.msk [vmem:[#allocation2] sm:$0xff] %vm170, %v168
    %172 = vst.msk [vmem:[#allocation2 + $0x8] sm:$0xff] %vm170, %v169
    // Predicated region
    $region10: #{char_embedder_forward.1} parent=1 // pred_check
      _
    $region11: #{char_embedder_forward.1} parent=1 // pred_check_branch
      %174 = sbr.rel (0) target = $region13
    $region12: #{char_embedder_forward.1} parent=1 // pred_region
      %s176 = ssub.s32 256, 256
      %177 = vsyncadd [#allocation3], %s176
      %s178 = sshll.u32 [#allocation2], 4
      %s179 = int_to_ptr.vmem [resolvable:$true] %s178
      %184 = dma.vmem_to_hbm [thread:$0]  %s179, 256, %s2, [#allocation3], 128, 128, 8
    $region13: #{char_embedder_forward.1} parent=1 // pred_fallthru
      _
    // Predicated region
    $region14: #{char_embedder_forward.1} parent=1 // pred_check
      _
    $region15: #{char_embedder_forward.1} parent=1 // pred_check_branch
      %186 = sbr.rel (0) target = $region17
    $region16: #{char_embedder_forward.1} parent=1 // pred_region
      %187 = dma.done [#allocation3], 256
    $region17: #{char_embedder_forward.1} parent=1 // pred_fallthru
      _
    %188 = vsyncpa [#allocation3], 1

</llo_original>
